<compile_context>
chip_gen: v6e
topology: v6e:2x2x1
jax: 0.10.0
libtpu: 0.0.40
codegen_flags: <defaults>
</compile_context>

<pallas_src>
import jax
import jax.numpy as jnp
from jax import lax
from jax.experimental import pallas as pl
from jax.experimental.pallas import tpu as pltpu

IN_FEATURES = 768
OUT_FEATURES = 570


def _linear_kernel(x_ref, w_ref, b_ref, o_ref):
    # x_ref: [TM, K], w_ref: [N, K] (native nn.Linear layout), b_ref: [1, N].
    # Contract on K (dim 1 of both operands) on the MXU, f32 accumulate,
    # then bias broadcast-add on the VPU.
    acc = lax.dot_general(
        x_ref[...], w_ref[...],
        dimension_numbers=(((1,), (1,)), ((), ())),
        preferred_element_type=jnp.float32,
    )
    o_ref[...] = (acc + b_ref[...]).astype(o_ref.dtype)


def placeholder_model(x, weight, bias, *, tm=512):
    """y = x @ weight.T + bias  (same semantics as torch.nn.Linear).

    x:      [M, 768] float32
    weight: [570, 768] float32   (PyTorch layout: [out_features, in_features])
    bias:   [570] float32
    returns [M, 570] float32
    """
    M, K = x.shape
    N, K2 = weight.shape
    assert K == IN_FEATURES and K2 == IN_FEATURES and N == OUT_FEATURES

    b2d = bias.reshape(1, N)  # [1, 570] — metadata-only reshape

    # Choose an M tile: multiple of 8 (sublane rule) when tiling, otherwise
    # fall back to the full array dim (always a legal block shape).
    TM = min(tm, M)
    if TM % 8 != 0:
        TM = M
    grid_m = pl.cdiv(M, TM)

    return pl.pallas_call(
        _linear_kernel,
        out_shape=jax.ShapeDtypeStruct((M, N), x.dtype),
        grid_spec=pltpu.PrefetchScalarGridSpec(
            num_scalar_prefetch=0,
            grid=(grid_m,),
            in_specs=[
                # x tile marches over M; weight/bias stay resident in VMEM.
                pl.BlockSpec((TM, K), lambda i: (i, 0)),
                pl.BlockSpec((N, K), lambda i: (0, 0)),
                pl.BlockSpec((1, N), lambda i: (0, 0)),
            ],
            out_specs=pl.BlockSpec((TM, N), lambda i: (i, 0)),
        ),
        compiler_params=pltpu.CompilerParams(
            dimension_semantics=("parallel",),
        ),
    )(x, weight, b2d)


if __name__ == "__main__":
    key = jax.random.PRNGKey(0)
    kx, kw, kb = jax.random.split(key, 3)

    # Deterministic synthetic parameters (torch.nn.Linear-style uniform init).
    bound = 1.0 / (IN_FEATURES ** 0.5)
    weight = jax.random.uniform(
        kw, (OUT_FEATURES, IN_FEATURES), jnp.float32, -bound, bound)
    bias = jax.random.uniform(
        kb, (OUT_FEATURES,), jnp.float32, -bound, bound)

    # Small batch of inputs consistent with the module: [8, 768].
    x = jax.random.normal(kx, (8, IN_FEATURES), jnp.float32)

    y = placeholder_model(x, weight, bias)
    y = jax.block_until_ready(y)

    # Reference check against plain JAX.
    y_ref = x @ weight.T + bias
    assert y.shape == (8, OUT_FEATURES)
    assert jnp.allclose(y, y_ref, atol=1e-4, rtol=1e-4)

    print("KERNEL_OK")
</pallas_src>

<mosaic_0001>
module attributes {stable_mosaic.version = 11 : i64} {
  func.func @_linear_kernel(%arg0: i32, %arg1: memref<8x768xf32, #tpu.memory_space<vmem>>, %arg2: memref<570x768xf32, #tpu.memory_space<vmem>>, %arg3: memref<1x570xf32, #tpu.memory_space<vmem>>, %arg4: memref<8x570xf32, #tpu.memory_space<vmem>>) attributes {dimension_semantics = [#tpu.dimension_semantics<parallel>], iteration_bounds = array<i64: 1>, scalar_prefetch = 0 : i64, scratch_operands = 0 : i64, tpu.core_type = #tpu.core_type<tc>, window_params = [{transform_indices = @transform_0, window_bounds = array<i64: 8, 768>}, {pipeline_mode = #tpu.pipeline_mode<synchronous>, transform_indices = @transform_1, window_bounds = array<i64: 570, 768>}, {pipeline_mode = #tpu.pipeline_mode<synchronous>, transform_indices = @transform_2, window_bounds = array<i64: 1, 570>}, {transform_indices = @transform_3, window_bounds = array<i64: 8, 570>}]} {
    %c0 = arith.constant 0 : index
    %c0_0 = arith.constant 0 : index
    %0 = vector.load %arg1[%c0, %c0_0] : memref<8x768xf32, #tpu.memory_space<vmem>>, vector<8x768xf32>
    %c0_1 = arith.constant 0 : index
    %c0_2 = arith.constant 0 : index
    %1 = vector.load %arg2[%c0_1, %c0_2] : memref<570x768xf32, #tpu.memory_space<vmem>>, vector<570x768xf32>
    %cst = arith.constant dense<0.000000e+00> : vector<8x570xf32>
    %2 = tpu.matmul %0, %1, %cst {dimension_numbers = #tpu.dot_dimension_numbers<[1], [1], [0], [0], [0, 0, 1, 0], [], []>} : vector<8x768xf32>, vector<570x768xf32>, vector<8x570xf32> -> vector<8x570xf32>
    %c0_3 = arith.constant 0 : index
    %c0_4 = arith.constant 0 : index
    %3 = vector.load %arg3[%c0_3, %c0_4] : memref<1x570xf32, #tpu.memory_space<vmem>>, vector<1x570xf32>
    %4 = vector.broadcast %3 : vector<1x570xf32> to vector<8x570xf32>
    %5 = arith.addf %2, %4 : vector<8x570xf32>
    %c0_5 = arith.constant 0 : index
    %c0_6 = arith.constant 0 : index
    %6 = vector.load %arg4[%c0_5, %c0_6] : memref<8x570xf32, #tpu.memory_space<vmem>>, vector<8x570xf32>
    tpu.vector_store %arg4[%c0_5, %c0_6], %5 {strides = array<i32>} : memref<8x570xf32, #tpu.memory_space<vmem>>, vector<8x570xf32>,
    return
  }
  func.func @transform_0(%arg0: i32) -> (i32, i32) {
    %c0_i32 = arith.constant 0 : i32
    %c0_i32_0 = arith.constant 0 : i32
    return %arg0, %c0_i32 : i32, i32
  }
  func.func @transform_1(%arg0: i32) -> (i32, i32) {
    %c0_i32 = arith.constant 0 : i32
    %c0_i32_0 = arith.constant 0 : i32
    %c0_i32_1 = arith.constant 0 : i32
    return %c0_i32, %c0_i32_0 : i32, i32
  }
  func.func @transform_2(%arg0: i32) -> (i32, i32) {
    %c0_i32 = arith.constant 0 : i32
    %c0_i32_0 = arith.constant 0 : i32
    %c0_i32_1 = arith.constant 0 : i32
    return %c0_i32, %c0_i32_0 : i32, i32
  }
  func.func @transform_3(%arg0: i32) -> (i32, i32) {
    %c0_i32 = arith.constant 0 : i32
    %c0_i32_0 = arith.constant 0 : i32
    return %arg0, %c0_i32 : i32, i32
  }
}

</mosaic_0001>

<llo_original>
// kernel: tpu_custom_call.1
$region0: #{tpu_custom_call.1}
  #allocation0 [shape = 'u32[]', space=smem, size = 0x4, offset = 0x4, fixed_abs, tag = 'smem constant byte address 0x4 - core index']
  #allocation1 [shape = 'u32[144,128]{1,0:T(1,128)}', space=vmem, size = 0x12000, scoped, tag = 'internal scratch']
  %s0 = inlined_call_operand.hbm [shape: f32[8,768], index: 0, kind: input, shape index: {}]
  %s1 = inlined_call_operand.hbm [shape: f32[570,768], index: 1, kind: input, shape index: {}]
  %s2 = inlined_call_operand.hbm [shape: f32[1,570], index: 2, kind: input, shape index: {}]
  %s3 = inlined_call_operand.hbm [shape: f32[8,570], index: 3, kind: output, shape index: {}]
  %s4 = sld [smem:[#allocation0]]
  $region34: #{tpu_custom_call.1} parent=0
    _
  %s6 = ssub.s32 1, %s4
  %s7 = scalar_select 0, %s6, %s4
  $region1: #{tpu_custom_call.1} parent=0
    #allocation2 [shape = 'u8[24576]{0}', space=vmem, size = 0x6000, scoped, tag = 'input window, operand 0, single buffered']
    #allocation3 [shape = 's32[1]{0}', space=sflag, size = 0x4, scoped, tag = 'scoped memory for tpu_custom_call.1']
    #allocation4 [shape = 's32[1]{0}', space=sflag, size = 0x4, scoped, tag = 'scoped memory for tpu_custom_call.1']
    #allocation5 [shape = 'u8[1769472]{0}', space=vmem, size = 0x1b0000, scoped, tag = 'input window, operand 1, single buffered']
    #allocation6 [shape = 's32[1]{0}', space=sflag, size = 0x4, scoped, tag = 'scoped memory for tpu_custom_call.1']
    #allocation7 [shape = 'u8[2560]{0}', space=vmem, size = 0xc00, scoped, tag = 'input window, operand 2, single buffered']
    #allocation8 [shape = 'u8[20480]{0}', space=vmem, size = 0x5000, scoped, tag = 'output window, operand 0, single buffered']
    %8 = vsyncpa [#allocation3], 0
    %9 = vsyncpa [#allocation6], 0
    %10 = vsyncpa [#allocation4], 0
    // Predicated region
    $region2: #{tpu_custom_call.1} parent=1 // pred_check
      _
    $region3: #{tpu_custom_call.1} parent=1 // pred_check_branch
      %12 = sbr.rel (0) target = $region5
    $region4: #{tpu_custom_call.1} parent=1 // pred_region
      %s14 = ssub.s32 768, 768
      %15 = vsyncadd [#allocation3], %s14
      %s17 = sshll.u32 [#allocation2], 4
      %s18 = int_to_ptr.vmem [resolvable:$true] %s17
      %20 = dma.hbm_to_vmem [thread:$0]  %s0, 768, %s18, [#allocation3]
    $region5: #{tpu_custom_call.1} parent=1 // pred_fallthru
      _
    // Predicated region
    $region6: #{tpu_custom_call.1} parent=1 // pred_check
      _
    $region7: #{tpu_custom_call.1} parent=1 // pred_check_branch
      %22 = sbr.rel (0) target = $region9
    $region8: #{tpu_custom_call.1} parent=1 // pred_region
      %s24 = ssub.s32 55296, 55296
      %25 = vsyncadd [#allocation6], %s24
      %s26 = sshll.u32 [#allocation5], 4
      %s27 = int_to_ptr.vmem [resolvable:$true] %s26
      %32 = dma.hbm_to_vmem [thread:$0]  %s1, 55296, %s27, [#allocation6], 768, 768, 48
    $region9: #{tpu_custom_call.1} parent=1 // pred_fallthru
      _
    // Predicated region
    $region10: #{tpu_custom_call.1} parent=1 // pred_check
      _
    $region11: #{tpu_custom_call.1} parent=1 // pred_check_branch
      %34 = sbr.rel (0) target = $region13
    $region12: #{tpu_custom_call.1} parent=1 // pred_region
      %s36 = ssub.s32 80, 80
      %37 = vsyncadd [#allocation6], %s36
      %s39 = sshll.u32 [#allocation7], 4
      %s40 = int_to_ptr.vmem [resolvable:$true] %s39
      %42 = dma.hbm_to_vmem [thread:$0]  %s2, 80, %s40, [#allocation6]
    $region13: #{tpu_custom_call.1} parent=1 // pred_fallthru
      _
    // Predicated region
    $region14: #{tpu_custom_call.1} parent=1 // pred_check
      _
    $region15: #{tpu_custom_call.1} parent=1 // pred_check_branch
      %44 = sbr.rel (0) target = $region17
    $region16: #{tpu_custom_call.1} parent=1 // pred_region
      %45 = dma.done [#allocation3], 768
    $region17: #{tpu_custom_call.1} parent=1 // pred_fallthru
      _
    // Predicated region
    $region18: #{tpu_custom_call.1} parent=1 // pred_check
      _
    $region19: #{tpu_custom_call.1} parent=1 // pred_check_branch
      %47 = sbr.rel (0) target = $region21
    $region20: #{tpu_custom_call.1} parent=1 // pred_region
      %48 = dma.done [#allocation6], 55296
    $region21: #{tpu_custom_call.1} parent=1 // pred_fallthru
      _
    // Predicated region
    $region22: #{tpu_custom_call.1} parent=1 // pred_check
      _
    $region23: #{tpu_custom_call.1} parent=1 // pred_check_branch
      %50 = sbr.rel (0) target = $region25
    $region24: #{tpu_custom_call.1} parent=1 // pred_region
      %51 = dma.done [#allocation6], 80
    $region25: #{tpu_custom_call.1} parent=1 // pred_fallthru
      _
    %v52 = vld [vmem:[#allocation2] sm:$0xff]
    %v53 = vld [vmem:[#allocation2 + $0x8] sm:$0xff]
    %v54 = vld [vmem:[#allocation2 + $0x10] sm:$0xff]
    %v55 = vld [vmem:[#allocation2 + $0x18] sm:$0xff]
    %v56 = vld [vmem:[#allocation2 + $0x20] sm:$0xff]
    %v57 = vld [vmem:[#allocation2 + $0x28] sm:$0xff]
    %v58 = vld [vmem:[#allocation5] sm:$0xff]
    %v59 = vld [vmem:[#allocation5 + $0x8] sm:$0xff]
    %v60 = vld [vmem:[#allocation5 + $0x10] sm:$0xff]
    %v61 = vld [vmem:[#allocation5 + $0x18] sm:$0xff]
    %v62 = vld [vmem:[#allocation5 + $0x20] sm:$0xff]
    %v63 = vld [vmem:[#allocation5 + $0x28] sm:$0xff]
    %v64 = vld [vmem:[#allocation5 + $0x30] sm:$0xff]
    %v65 = vld [vmem:[#allocation5 + $0x38] sm:$0xff]
    %v66 = vld [vmem:[#allocation5 + $0x40] sm:$0xff]
    %v67 = vld [vmem:[#allocation5 + $0x48] sm:$0xff]
    %v68 = vld [vmem:[#allocation5 + $0x50] sm:$0xff]
    %v69 = vld [vmem:[#allocation5 + $0x58] sm:$0xff]
    %v70 = vld [vmem:[#allocation5 + $0x60] sm:$0xff]
    %v71 = vld [vmem:[#allocation5 + $0x68] sm:$0xff]
    %v72 = vld [vmem:[#allocation5 + $0x70] sm:$0xff]
    %v73 = vld [vmem:[#allocation5 + $0x78] sm:$0xff]
    %v74 = vld [vmem:[#allocation5 + $0x80] sm:$0xff]
    %v75 = vld [vmem:[#allocation5 + $0x88] sm:$0xff]
    %v76 = vld [vmem:[#allocation5 + $0x90] sm:$0xff]
    %v77 = vld [vmem:[#allocation5 + $0x98] sm:$0xff]
    %v78 = vld [vmem:[#allocation5 + $0xa0] sm:$0xff]
    %v79 = vld [vmem:[#allocation5 + $0xa8] sm:$0xff]
    %v80 = vld [vmem:[#allocation5 + $0xb0] sm:$0xff]
    %v81 = vld [vmem:[#allocation5 + $0xb8] sm:$0xff]
    %v82 = vld [vmem:[#allocation5 + $0xc0] sm:$0xff]
    %v83 = vld [vmem:[#allocation5 + $0xc8] sm:$0xff]
    %v84 = vld [vmem:[#allocation5 + $0xd0] sm:$0xff]
    %v85 = vld [vmem:[#allocation5 + $0xd8] sm:$0xff]
    %v86 = vld [vmem:[#allocation5 + $0xe0] sm:$0xff]
    %v87 = vld [vmem:[#allocation5 + $0xe8] sm:$0xff]
    %v88 = vld [vmem:[#allocation5 + $0xf0] sm:$0xff]
    %v89 = vld [vmem:[#allocation5 + $0xf8] sm:$0xff]
    %v90 = vld [vmem:[#allocation5 + $0x100] sm:$0xff]
    %v91 = vld [vmem:[#allocation5 + $0x108] sm:$0xff]
    %v92 = vld [vmem:[#allocation5 + $0x110] sm:$0xff]
    %v93 = vld [vmem:[#allocation5 + $0x118] sm:$0xff]
    %v94 = vld [vmem:[#allocation5 + $0x120] sm:$0xff]
    %v95 = vld [vmem:[#allocation5 + $0x128] sm:$0xff]
    %v96 = vld [vmem:[#allocation5 + $0x130] sm:$0xff]
    %v97 = vld [vmem:[#allocation5 + $0x138] sm:$0xff]
    %v98 = vld [vmem:[#allocation5 + $0x140] sm:$0xff]
    %v99 = vld [vmem:[#allocation5 + $0x148] sm:$0xff]
    %v100 = vld [vmem:[#allocation5 + $0x150] sm:$0xff]
    %v101 = vld [vmem:[#allocation5 + $0x158] sm:$0xff]
    %v102 = vld [vmem:[#allocation5 + $0x160] sm:$0xff]
    %v103 = vld [vmem:[#allocation5 + $0x168] sm:$0xff]
    %v104 = vld [vmem:[#allocation5 + $0x170] sm:$0xff]
    %v105 = vld [vmem:[#allocation5 + $0x178] sm:$0xff]
    %v106 = vld [vmem:[#allocation5 + $0x180] sm:$0xff]
    %v107 = vld [vmem:[#allocation5 + $0x188] sm:$0xff]
    %v108 = vld [vmem:[#allocation5 + $0x190] sm:$0xff]
    %v109 = vld [vmem:[#allocation5 + $0x198] sm:$0xff]
    %v110 = vld [vmem:[#allocation5 + $0x1a0] sm:$0xff]
    %v111 = vld [vmem:[#allocation5 + $0x1a8] sm:$0xff]
    %v112 = vld [vmem:[#allocation5 + $0x1b0] sm:$0xff]
    %v113 = vld [vmem:[#allocation5 + $0x1b8] sm:$0xff]
    %v114 = vld [vmem:[#allocation5 + $0x1c0] sm:$0xff]
    %v115 = vld [vmem:[#allocation5 + $0x1c8] sm:$0xff]
    %v116 = vld [vmem:[#allocation5 + $0x1d0] sm:$0xff]
    %v117 = vld [vmem:[#allocation5 + $0x1d8] sm:$0xff]
    %v118 = vld [vmem:[#allocation5 + $0x1e0] sm:$0xff]
    %v119 = vld [vmem:[#allocation5 + $0x1e8] sm:$0xff]
    %v120 = vld [vmem:[#allocation5 + $0x1f0] sm:$0xff]
    %v121 = vld [vmem:[#allocation5 + $0x1f8] sm:$0xff]
    %v122 = vld [vmem:[#allocation5 + $0x200] sm:$0xff]
    %v123 = vld [vmem:[#allocation5 + $0x208] sm:$0xff]
    %v124 = vld [vmem:[#allocation5 + $0x210] sm:$0xff]
    %v125 = vld [vmem:[#allocation5 + $0x218] sm:$0xff]
    %v126 = vld [vmem:[#allocation5 + $0x220] sm:$0xff]
    %v127 = vld [vmem:[#allocation5 + $0x228] sm:$0xff]
    %v128 = vld [vmem:[#allocation5 + $0x230] sm:$0xff]
    %v129 = vld [vmem:[#allocation5 + $0x238] sm:$0xff]
    %v130 = vld [vmem:[#allocation5 + $0x240] sm:$0xff]
    %v131 = vld [vmem:[#allocation5 + $0x248] sm:$0xff]
    %v132 = vld [vmem:[#allocation5 + $0x250] sm:$0xff]
    %v133 = vld [vmem:[#allocation5 + $0x258] sm:$0xff]
    %v134 = vld [vmem:[#allocation5 + $0x260] sm:$0xff]
    %v135 = vld [vmem:[#allocation5 + $0x268] sm:$0xff]
    %v136 = vld [vmem:[#allocation5 + $0x270] sm:$0xff]
    %v137 = vld [vmem:[#allocation5 + $0x278] sm:$0xff]
    %v138 = vld [vmem:[#allocation5 + $0x280] sm:$0xff]
    %v139 = vld [vmem:[#allocation5 + $0x288] sm:$0xff]
    %v140 = vld [vmem:[#allocation5 + $0x290] sm:$0xff]
    %v141 = vld [vmem:[#allocation5 + $0x298] sm:$0xff]
    %v142 = vld [vmem:[#allocation5 + $0x2a0] sm:$0xff]
    %v143 = vld [vmem:[#allocation5 + $0x2a8] sm:$0xff]
    %v144 = vld [vmem:[#allocation5 + $0x2b0] sm:$0xff]
    %v145 = vld [vmem:[#allocation5 + $0x2b8] sm:$0xff]
    %v146 = vld [vmem:[#allocation5 + $0x2c0] sm:$0xff]
    %v147 = vld [vmem:[#allocation5 + $0x2c8] sm:$0xff]
    %v148 = vld [vmem:[#allocation5 + $0x2d0] sm:$0xff]
    %v149 = vld [vmem:[#allocation5 + $0x2d8] sm:$0xff]
    %v150 = vld [vmem:[#allocation5 + $0x2e0] sm:$0xff]
    %v151 = vld [vmem:[#allocation5 + $0x2e8] sm:$0xff]
    %v152 = vld [vmem:[#allocation5 + $0x2f0] sm:$0xff]
    %v153 = vld [vmem:[#allocation5 + $0x2f8] sm:$0xff]
    %v154 = vld [vmem:[#allocation5 + $0x300] sm:$0xff]
    %v155 = vld [vmem:[#allocation5 + $0x308] sm:$0xff]
    %v156 = vld [vmem:[#allocation5 + $0x310] sm:$0xff]
    %v157 = vld [vmem:[#allocation5 + $0x318] sm:$0xff]
    %v158 = vld [vmem:[#allocation5 + $0x320] sm:$0xff]
    %v159 = vld [vmem:[#allocation5 + $0x328] sm:$0xff]
    %v160 = vld [vmem:[#allocation5 + $0x330] sm:$0xff]
    %v161 = vld [vmem:[#allocation5 + $0x338] sm:$0xff]
    %v162 = vld [vmem:[#allocation5 + $0x340] sm:$0xff]
    %v163 = vld [vmem:[#allocation5 + $0x348] sm:$0xff]
    %v164 = vld [vmem:[#allocation5 + $0x350] sm:$0xff]
    %v165 = vld [vmem:[#allocation5 + $0x358] sm:$0xff]
    %v166 = vld [vmem:[#allocation5 + $0x360] sm:$0xff]
    %v167 = vld [vmem:[#allocation5 + $0x368] sm:$0xff]
    %v168 = vld [vmem:[#allocation5 + $0x370] sm:$0xff]
    %v169 = vld [vmem:[#allocation5 + $0x378] sm:$0xff]
    %v170 = vld [vmem:[#allocation5 + $0x380] sm:$0xff]
    %v171 = vld [vmem:[#allocation5 + $0x388] sm:$0xff]
    %v172 = vld [vmem:[#allocation5 + $0x390] sm:$0xff]
    %v173 = vld [vmem:[#allocation5 + $0x398] sm:$0xff]
    %v174 = vld [vmem:[#allocation5 + $0x3a0] sm:$0xff]
    %v175 = vld [vmem:[#allocation5 + $0x3a8] sm:$0xff]
    %v176 = vld [vmem:[#allocation5 + $0x3b0] sm:$0xff]
    %v177 = vld [vmem:[#allocation5 + $0x3b8] sm:$0xff]
    %v178 = vld [vmem:[#allocation5 + $0x3c0] sm:$0xff]
    %v179 = vld [vmem:[#allocation5 + $0x3c8] sm:$0xff]
    %v180 = vld [vmem:[#allocation5 + $0x3d0] sm:$0xff]
    %v181 = vld [vmem:[#allocation5 + $0x3d8] sm:$0xff]
    %v182 = vld [vmem:[#allocation5 + $0x3e0] sm:$0xff]
    %v183 = vld [vmem:[#allocation5 + $0x3e8] sm:$0xff]
    %v184 = vld [vmem:[#allocation5 + $0x3f0] sm:$0xff]
    %v185 = vld [vmem:[#allocation5 + $0x3f8] sm:$0xff]
    %v186 = vld [vmem:[#allocation5 + $0x400] sm:$0xff]
    %v187 = vld [vmem:[#allocation5 + $0x408] sm:$0xff]
    %v188 = vld [vmem:[#allocation5 + $0x410] sm:$0xff]
    %v189 = vld [vmem:[#allocation5 + $0x418] sm:$0xff]
    %v190 = vld [vmem:[#allocation5 + $0x420] sm:$0xff]
    %v191 = vld [vmem:[#allocation5 + $0x428] sm:$0xff]
    %v192 = vld [vmem:[#allocation5 + $0x430] sm:$0xff]
    %v193 = vld [vmem:[#allocation5 + $0x438] sm:$0xff]
    %v194 = vld [vmem:[#allocation5 + $0x440] sm:$0xff]
    %v195 = vld [vmem:[#allocation5 + $0x448] sm:$0xff]
    %v196 = vld [vmem:[#allocation5 + $0x450] sm:$0xff]
    %v197 = vld [vmem:[#allocation5 + $0x458] sm:$0xff]
    %v198 = vld [vmem:[#allocation5 + $0x460] sm:$0xff]
    %v199 = vld [vmem:[#allocation5 + $0x468] sm:$0xff]
    %v200 = vld [vmem:[#allocation5 + $0x470] sm:$0xff]
    %v201 = vld [vmem:[#allocation5 + $0x478] sm:$0xff]
    %v202 = vld [vmem:[#allocation5 + $0x480] sm:$0xff]
    %v203 = vld [vmem:[#allocation5 + $0x488] sm:$0xff]
    %v204 = vld [vmem:[#allocation5 + $0x490] sm:$0xff]
    %v205 = vld [vmem:[#allocation5 + $0x498] sm:$0xff]
    %v206 = vld [vmem:[#allocation5 + $0x4a0] sm:$0xff]
    %v207 = vld [vmem:[#allocation5 + $0x4a8] sm:$0xff]
    %v208 = vld [vmem:[#allocation5 + $0x4b0] sm:$0xff]
    %v209 = vld [vmem:[#allocation5 + $0x4b8] sm:$0xff]
    %v210 = vld [vmem:[#allocation5 + $0x4c0] sm:$0xff]
    %v211 = vld [vmem:[#allocation5 + $0x4c8] sm:$0xff]
    %v212 = vld [vmem:[#allocation5 + $0x4d0] sm:$0xff]
    %v213 = vld [vmem:[#allocation5 + $0x4d8] sm:$0xff]
    %v214 = vld [vmem:[#allocation5 + $0x4e0] sm:$0xff]
    %v215 = vld [vmem:[#allocation5 + $0x4e8] sm:$0xff]
    %v216 = vld [vmem:[#allocation5 + $0x4f0] sm:$0xff]
    %v217 = vld [vmem:[#allocation5 + $0x4f8] sm:$0xff]
    %v218 = vld [vmem:[#allocation5 + $0x500] sm:$0xff]
    %v219 = vld [vmem:[#allocation5 + $0x508] sm:$0xff]
    %v220 = vld [vmem:[#allocation5 + $0x510] sm:$0xff]
    %v221 = vld [vmem:[#allocation5 + $0x518] sm:$0xff]
    %v222 = vld [vmem:[#allocation5 + $0x520] sm:$0xff]
    %v223 = vld [vmem:[#allocation5 + $0x528] sm:$0xff]
    %v224 = vld [vmem:[#allocation5 + $0x530] sm:$0xff]
    %v225 = vld [vmem:[#allocation5 + $0x538] sm:$0xff]
    %v226 = vld [vmem:[#allocation5 + $0x540] sm:$0xff]
    %v227 = vld [vmem:[#allocation5 + $0x548] sm:$0xff]
    %v228 = vld [vmem:[#allocation5 + $0x550] sm:$0xff]
    %v229 = vld [vmem:[#allocation5 + $0x558] sm:$0xff]
    %v230 = vld [vmem:[#allocation5 + $0x560] sm:$0xff]
    %v231 = vld [vmem:[#allocation5 + $0x568] sm:$0xff]
    %v232 = vld [vmem:[#allocation5 + $0x570] sm:$0xff]
    %v233 = vld [vmem:[#allocation5 + $0x578] sm:$0xff]
    %v234 = vld [vmem:[#allocation5 + $0x580] sm:$0xff]
    %v235 = vld [vmem:[#allocation5 + $0x588] sm:$0xff]
    %v236 = vld [vmem:[#allocation5 + $0x590] sm:$0xff]
    %v237 = vld [vmem:[#allocation5 + $0x598] sm:$0xff]
    %v238 = vld [vmem:[#allocation5 + $0x5a0] sm:$0xff]
    %v239 = vld [vmem:[#allocation5 + $0x5a8] sm:$0xff]
    %v240 = vld [vmem:[#allocation5 + $0x5b0] sm:$0xff]
    %v241 = vld [vmem:[#allocation5 + $0x5b8] sm:$0xff]
    %v242 = vld [vmem:[#allocation5 + $0x5c0] sm:$0xff]
    %v243 = vld [vmem:[#allocation5 + $0x5c8] sm:$0xff]
    %v244 = vld [vmem:[#allocation5 + $0x5d0] sm:$0xff]
    %v245 = vld [vmem:[#allocation5 + $0x5d8] sm:$0xff]
    %v246 = vld [vmem:[#allocation5 + $0x5e0] sm:$0xff]
    %v247 = vld [vmem:[#allocation5 + $0x5e8] sm:$0xff]
    %v248 = vld [vmem:[#allocation5 + $0x5f0] sm:$0xff]
    %v249 = vld [vmem:[#allocation5 + $0x5f8] sm:$0xff]
    %v250 = vld [vmem:[#allocation5 + $0x600] sm:$0xff]
    %v251 = vld [vmem:[#allocation5 + $0x608] sm:$0xff]
    %v252 = vld [vmem:[#allocation5 + $0x610] sm:$0xff]
    %v253 = vld [vmem:[#allocation5 + $0x618] sm:$0xff]
    %v254 = vld [vmem:[#allocation5 + $0x620] sm:$0xff]
    %v255 = vld [vmem:[#allocation5 + $0x628] sm:$0xff]
    %v256 = vld [vmem:[#allocation5 + $0x630] sm:$0xff]
    %v257 = vld [vmem:[#allocation5 + $0x638] sm:$0xff]
    %v258 = vld [vmem:[#allocation5 + $0x640] sm:$0xff]
    %v259 = vld [vmem:[#allocation5 + $0x648] sm:$0xff]
    %v260 = vld [vmem:[#allocation5 + $0x650] sm:$0xff]
    %v261 = vld [vmem:[#allocation5 + $0x658] sm:$0xff]
    %v262 = vld [vmem:[#allocation5 + $0x660] sm:$0xff]
    %v263 = vld [vmem:[#allocation5 + $0x668] sm:$0xff]
    %v264 = vld [vmem:[#allocation5 + $0x670] sm:$0xff]
    %v265 = vld [vmem:[#allocation5 + $0x678] sm:$0xff]
    %v266 = vld [vmem:[#allocation5 + $0x680] sm:$0xff]
    %v267 = vld [vmem:[#allocation5 + $0x688] sm:$0xff]
    %v268 = vld [vmem:[#allocation5 + $0x690] sm:$0xff]
    %v269 = vld [vmem:[#allocation5 + $0x698] sm:$0xff]
    %v270 = vld [vmem:[#allocation5 + $0x6a0] sm:$0xff]
    %v271 = vld [vmem:[#allocation5 + $0x6a8] sm:$0xff]
    %v272 = vld [vmem:[#allocation5 + $0x6b0] sm:$0xff]
    %v273 = vld [vmem:[#allocation5 + $0x6b8] sm:$0xff]
    %v274 = vld [vmem:[#allocation5 + $0x6c0] sm:$0xff]
    %v275 = vld [vmem:[#allocation5 + $0x6c8] sm:$0xff]
    %v276 = vld [vmem:[#allocation5 + $0x6d0] sm:$0xff]
    %v277 = vld [vmem:[#allocation5 + $0x6d8] sm:$0xff]
    %v278 = vld [vmem:[#allocation5 + $0x6e0] sm:$0xff]
    %v279 = vld [vmem:[#allocation5 + $0x6e8] sm:$0xff]
    %v280 = vld [vmem:[#allocation5 + $0x6f0] sm:$0xff]
    %v281 = vld [vmem:[#allocation5 + $0x6f8] sm:$0xff]
    %v282 = vld [vmem:[#allocation5 + $0x700] sm:$0xff]
    %v283 = vld [vmem:[#allocation5 + $0x708] sm:$0xff]
    %v284 = vld [vmem:[#allocation5 + $0x710] sm:$0xff]
    %v285 = vld [vmem:[#allocation5 + $0x718] sm:$0xff]
    %v286 = vld [vmem:[#allocation5 + $0x720] sm:$0xff]
    %v287 = vld [vmem:[#allocation5 + $0x728] sm:$0xff]
    %v288 = vld [vmem:[#allocation5 + $0x730] sm:$0xff]
    %v289 = vld [vmem:[#allocation5 + $0x738] sm:$0xff]
    %v290 = vld [vmem:[#allocation5 + $0x740] sm:$0xff]
    %v291 = vld [vmem:[#allocation5 + $0x748] sm:$0xff]
    %v292 = vld [vmem:[#allocation5 + $0x750] sm:$0xff]
    %v293 = vld [vmem:[#allocation5 + $0x758] sm:$0xff]
    %v294 = vld [vmem:[#allocation5 + $0x760] sm:$0xff]
    %v295 = vld [vmem:[#allocation5 + $0x768] sm:$0xff]
    %v296 = vld [vmem:[#allocation5 + $0x770] sm:$0xff]
    %v297 = vld [vmem:[#allocation5 + $0x778] sm:$0xff]
    %v298 = vld [vmem:[#allocation5 + $0x780] sm:$0xff]
    %v299 = vld [vmem:[#allocation5 + $0x788] sm:$0xff]
    %v300 = vld [vmem:[#allocation5 + $0x790] sm:$0xff]
    %v301 = vld [vmem:[#allocation5 + $0x798] sm:$0xff]
    %v302 = vld [vmem:[#allocation5 + $0x7a0] sm:$0xff]
    %v303 = vld [vmem:[#allocation5 + $0x7a8] sm:$0xff]
    %v304 = vld [vmem:[#allocation5 + $0x7b0] sm:$0xff]
    %v305 = vld [vmem:[#allocation5 + $0x7b8] sm:$0xff]
    %v306 = vld [vmem:[#allocation5 + $0x7c0] sm:$0xff]
    %v307 = vld [vmem:[#allocation5 + $0x7c8] sm:$0xff]
    %v308 = vld [vmem:[#allocation5 + $0x7d0] sm:$0xff]
    %v309 = vld [vmem:[#allocation5 + $0x7d8] sm:$0xff]
    %v310 = vld [vmem:[#allocation5 + $0x7e0] sm:$0xff]
    %v311 = vld [vmem:[#allocation5 + $0x7e8] sm:$0xff]
    %v312 = vld [vmem:[#allocation5 + $0x7f0] sm:$0xff]
    %v313 = vld [vmem:[#allocation5 + $0x7f8] sm:$0xff]
    %v314 = vld [vmem:[#allocation5 + $0x800] sm:$0xff]
    %v315 = vld [vmem:[#allocation5 + $0x808] sm:$0xff]
    %v316 = vld [vmem:[#allocation5 + $0x810] sm:$0xff]
    %v317 = vld [vmem:[#allocation5 + $0x818] sm:$0xff]
    %v318 = vld [vmem:[#allocation5 + $0x820] sm:$0xff]
    %v319 = vld [vmem:[#allocation5 + $0x828] sm:$0xff]
    %v320 = vld [vmem:[#allocation5 + $0x830] sm:$0xff]
    %v321 = vld [vmem:[#allocation5 + $0x838] sm:$0xff]
    %v322 = vld [vmem:[#allocation5 + $0x840] sm:$0xff]
    %v323 = vld [vmem:[#allocation5 + $0x848] sm:$0xff]
    %v324 = vld [vmem:[#allocation5 + $0x850] sm:$0xff]
    %v325 = vld [vmem:[#allocation5 + $0x858] sm:$0xff]
    %v326 = vld [vmem:[#allocation5 + $0x860] sm:$0xff]
    %v327 = vld [vmem:[#allocation5 + $0x868] sm:$0xff]
    %v328 = vld [vmem:[#allocation5 + $0x870] sm:$0xff]
    %v329 = vld [vmem:[#allocation5 + $0x878] sm:$0xff]
    %v330 = vld [vmem:[#allocation5 + $0x880] sm:$0xff]
    %v331 = vld [vmem:[#allocation5 + $0x888] sm:$0xff]
    %v332 = vld [vmem:[#allocation5 + $0x890] sm:$0xff]
    %v333 = vld [vmem:[#allocation5 + $0x898] sm:$0xff]
    %v334 = vld [vmem:[#allocation5 + $0x8a0] sm:$0xff]
    %v335 = vld [vmem:[#allocation5 + $0x8a8] sm:$0xff]
    %v336 = vld [vmem:[#allocation5 + $0x8b0] sm:$0xff]
    %v337 = vld [vmem:[#allocation5 + $0x8b8] sm:$0xff]
    %v338 = vld [vmem:[#allocation5 + $0x8c0] sm:$0xff]
    %v339 = vld [vmem:[#allocation5 + $0x8c8] sm:$0xff]
    %v340 = vld [vmem:[#allocation5 + $0x8d0] sm:$0xff]
    %v341 = vld [vmem:[#allocation5 + $0x8d8] sm:$0xff]
    %v342 = vld [vmem:[#allocation5 + $0x8e0] sm:$0xff]
    %v343 = vld [vmem:[#allocation5 + $0x8e8] sm:$0xff]
    %v344 = vld [vmem:[#allocation5 + $0x8f0] sm:$0xff]
    %v345 = vld [vmem:[#allocation5 + $0x8f8] sm:$0xff]
    %v346 = vld [vmem:[#allocation5 + $0x900] sm:$0xff]
    %v347 = vld [vmem:[#allocation5 + $0x908] sm:$0xff]
    %v348 = vld [vmem:[#allocation5 + $0x910] sm:$0xff]
    %v349 = vld [vmem:[#allocation5 + $0x918] sm:$0xff]
    %v350 = vld [vmem:[#allocation5 + $0x920] sm:$0xff]
    %v351 = vld [vmem:[#allocation5 + $0x928] sm:$0xff]
    %v352 = vld [vmem:[#allocation5 + $0x930] sm:$0xff]
    %v353 = vld [vmem:[#allocation5 + $0x938] sm:$0xff]
    %v354 = vld [vmem:[#allocation5 + $0x940] sm:$0xff]
    %v355 = vld [vmem:[#allocation5 + $0x948] sm:$0xff]
    %v356 = vld [vmem:[#allocation5 + $0x950] sm:$0xff]
    %v357 = vld [vmem:[#allocation5 + $0x958] sm:$0xff]
    %v358 = vld [vmem:[#allocation5 + $0x960] sm:$0xff]
    %v359 = vld [vmem:[#allocation5 + $0x968] sm:$0xff]
    %v360 = vld [vmem:[#allocation5 + $0x970] sm:$0xff]
    %v361 = vld [vmem:[#allocation5 + $0x978] sm:$0xff]
    %v362 = vld [vmem:[#allocation5 + $0x980] sm:$0xff]
    %v363 = vld [vmem:[#allocation5 + $0x988] sm:$0xff]
    %v364 = vld [vmem:[#allocation5 + $0x990] sm:$0xff]
    %v365 = vld [vmem:[#allocation5 + $0x998] sm:$0xff]
    %v366 = vld [vmem:[#allocation5 + $0x9a0] sm:$0xff]
    %v367 = vld [vmem:[#allocation5 + $0x9a8] sm:$0xff]
    %v368 = vld [vmem:[#allocation5 + $0x9b0] sm:$0xff]
    %v369 = vld [vmem:[#allocation5 + $0x9b8] sm:$0xff]
    %v370 = vld [vmem:[#allocation5 + $0x9c0] sm:$0xff]
    %v371 = vld [vmem:[#allocation5 + $0x9c8] sm:$0xff]
    %v372 = vld [vmem:[#allocation5 + $0x9d0] sm:$0xff]
    %v373 = vld [vmem:[#allocation5 + $0x9d8] sm:$0xff]
    %v374 = vld [vmem:[#allocation5 + $0x9e0] sm:$0xff]
    %v375 = vld [vmem:[#allocation5 + $0x9e8] sm:$0xff]
    %v376 = vld [vmem:[#allocation5 + $0x9f0] sm:$0xff]
    %v377 = vld [vmem:[#allocation5 + $0x9f8] sm:$0xff]
    %v378 = vld [vmem:[#allocation5 + $0xa00] sm:$0xff]
    %v379 = vld [vmem:[#allocation5 + $0xa08] sm:$0xff]
    %v380 = vld [vmem:[#allocation5 + $0xa10] sm:$0xff]
    %v381 = vld [vmem:[#allocation5 + $0xa18] sm:$0xff]
    %v382 = vld [vmem:[#allocation5 + $0xa20] sm:$0xff]
    %v383 = vld [vmem:[#allocation5 + $0xa28] sm:$0xff]
    %v384 = vld [vmem:[#allocation5 + $0xa30] sm:$0xff]
    %v385 = vld [vmem:[#allocation5 + $0xa38] sm:$0xff]
    %v386 = vld [vmem:[#allocation5 + $0xa40] sm:$0xff]
    %v387 = vld [vmem:[#allocation5 + $0xa48] sm:$0xff]
    %v388 = vld [vmem:[#allocation5 + $0xa50] sm:$0xff]
    %v389 = vld [vmem:[#allocation5 + $0xa58] sm:$0xff]
    %v390 = vld [vmem:[#allocation5 + $0xa60] sm:$0xff]
    %v391 = vld [vmem:[#allocation5 + $0xa68] sm:$0xff]
    %v392 = vld [vmem:[#allocation5 + $0xa70] sm:$0xff]
    %v393 = vld [vmem:[#allocation5 + $0xa78] sm:$0xff]
    %v394 = vld [vmem:[#allocation5 + $0xa80] sm:$0xff]
    %v395 = vld [vmem:[#allocation5 + $0xa88] sm:$0xff]
    %v396 = vld [vmem:[#allocation5 + $0xa90] sm:$0xff]
    %v397 = vld [vmem:[#allocation5 + $0xa98] sm:$0xff]
    %v398 = vld [vmem:[#allocation5 + $0xaa0] sm:$0xff]
    %v399 = vld [vmem:[#allocation5 + $0xaa8] sm:$0xff]
    %v400 = vld [vmem:[#allocation5 + $0xab0] sm:$0xff]
    %v401 = vld [vmem:[#allocation5 + $0xab8] sm:$0xff]
    %v402 = vld [vmem:[#allocation5 + $0xac0] sm:$0xff]
    %v403 = vld [vmem:[#allocation5 + $0xac8] sm:$0xff]
    %v404 = vld [vmem:[#allocation5 + $0xad0] sm:$0xff]
    %v405 = vld [vmem:[#allocation5 + $0xad8] sm:$0xff]
    %v406 = vld [vmem:[#allocation5 + $0xae0] sm:$0xff]
    %v407 = vld [vmem:[#allocation5 + $0xae8] sm:$0xff]
    %v408 = vld [vmem:[#allocation5 + $0xaf0] sm:$0xff]
    %v409 = vld [vmem:[#allocation5 + $0xaf8] sm:$0xff]
    %v410 = vld [vmem:[#allocation5 + $0xb00] sm:$0xff]
    %v411 = vld [vmem:[#allocation5 + $0xb08] sm:$0xff]
    %v412 = vld [vmem:[#allocation5 + $0xb10] sm:$0xff]
    %v413 = vld [vmem:[#allocation5 + $0xb18] sm:$0xff]
    %v414 = vld [vmem:[#allocation5 + $0xb20] sm:$0xff]
    %v415 = vld [vmem:[#allocation5 + $0xb28] sm:$0xff]
    %v416 = vld [vmem:[#allocation5 + $0xb30] sm:$0xff]
    %v417 = vld [vmem:[#allocation5 + $0xb38] sm:$0xff]
    %v418 = vld [vmem:[#allocation5 + $0xb40] sm:$0xff]
    %v419 = vld [vmem:[#allocation5 + $0xb48] sm:$0xff]
    %v420 = vld [vmem:[#allocation5 + $0xb50] sm:$0xff]
    %v421 = vld [vmem:[#allocation5 + $0xb58] sm:$0xff]
    %v422 = vld [vmem:[#allocation5 + $0xb60] sm:$0xff]
    %v423 = vld [vmem:[#allocation5 + $0xb68] sm:$0xff]
    %v424 = vld [vmem:[#allocation5 + $0xb70] sm:$0xff]
    %v425 = vld [vmem:[#allocation5 + $0xb78] sm:$0xff]
    %v426 = vld [vmem:[#allocation5 + $0xb80] sm:$0xff]
    %v427 = vld [vmem:[#allocation5 + $0xb88] sm:$0xff]
    %v428 = vld [vmem:[#allocation5 + $0xb90] sm:$0xff]
    %v429 = vld [vmem:[#allocation5 + $0xb98] sm:$0xff]
    %v430 = vld [vmem:[#allocation5 + $0xba0] sm:$0xff]
    %v431 = vld [vmem:[#allocation5 + $0xba8] sm:$0xff]
    %v432 = vld [vmem:[#allocation5 + $0xbb0] sm:$0xff]
    %v433 = vld [vmem:[#allocation5 + $0xbb8] sm:$0xff]
    %v434 = vld [vmem:[#allocation5 + $0xbc0] sm:$0xff]
    %v435 = vld [vmem:[#allocation5 + $0xbc8] sm:$0xff]
    %v436 = vld [vmem:[#allocation5 + $0xbd0] sm:$0xff]
    %v437 = vld [vmem:[#allocation5 + $0xbd8] sm:$0xff]
    %v438 = vld [vmem:[#allocation5 + $0xbe0] sm:$0xff]
    %v439 = vld [vmem:[#allocation5 + $0xbe8] sm:$0xff]
    %v440 = vld [vmem:[#allocation5 + $0xbf0] sm:$0xff]
    %v441 = vld [vmem:[#allocation5 + $0xbf8] sm:$0xff]
    %v442 = vld [vmem:[#allocation5 + $0xc00] sm:$0xff]
    %v443 = vld [vmem:[#allocation5 + $0xc08] sm:$0xff]
    %v444 = vld [vmem:[#allocation5 + $0xc10] sm:$0xff]
    %v445 = vld [vmem:[#allocation5 + $0xc18] sm:$0xff]
    %v446 = vld [vmem:[#allocation5 + $0xc20] sm:$0xff]
    %v447 = vld [vmem:[#allocation5 + $0xc28] sm:$0xff]
    %v448 = vld [vmem:[#allocation5 + $0xc30] sm:$0xff]
    %v449 = vld [vmem:[#allocation5 + $0xc38] sm:$0xff]
    %v450 = vld [vmem:[#allocation5 + $0xc40] sm:$0xff]
    %v451 = vld [vmem:[#allocation5 + $0xc48] sm:$0xff]
    %v452 = vld [vmem:[#allocation5 + $0xc50] sm:$0xff]
    %v453 = vld [vmem:[#allocation5 + $0xc58] sm:$0xff]
    %v454 = vld [vmem:[#allocation5 + $0xc60] sm:$0xff]
    %v455 = vld [vmem:[#allocation5 + $0xc68] sm:$0xff]
    %v456 = vld [vmem:[#allocation5 + $0xc70] sm:$0xff]
    %v457 = vld [vmem:[#allocation5 + $0xc78] sm:$0xff]
    %v458 = vld [vmem:[#allocation5 + $0xc80] sm:$0xff]
    %v459 = vld [vmem:[#allocation5 + $0xc88] sm:$0xff]
    %v460 = vld [vmem:[#allocation5 + $0xc90] sm:$0xff]
    %v461 = vld [vmem:[#allocation5 + $0xc98] sm:$0xff]
    %v462 = vld [vmem:[#allocation5 + $0xca0] sm:$0xff]
    %v463 = vld [vmem:[#allocation5 + $0xca8] sm:$0xff]
    %v464 = vld [vmem:[#allocation5 + $0xcb0] sm:$0xff]
    %v465 = vld [vmem:[#allocation5 + $0xcb8] sm:$0xff]
    %v466 = vld [vmem:[#allocation5 + $0xcc0] sm:$0xff]
    %v467 = vld [vmem:[#allocation5 + $0xcc8] sm:$0xff]
    %v468 = vld [vmem:[#allocation5 + $0xcd0] sm:$0xff]
    %v469 = vld [vmem:[#allocation5 + $0xcd8] sm:$0xff]
    %v470 = vld [vmem:[#allocation5 + $0xce0] sm:$0xff]
    %v471 = vld [vmem:[#allocation5 + $0xce8] sm:$0xff]
    %v472 = vld [vmem:[#allocation5 + $0xcf0] sm:$0xff]
    %v473 = vld [vmem:[#allocation5 + $0xcf8] sm:$0xff]
    %v474 = vld [vmem:[#allocation5 + $0xd00] sm:$0xff]
    %v475 = vld [vmem:[#allocation5 + $0xd08] sm:$0xff]
    %v476 = vld [vmem:[#allocation5 + $0xd10] sm:$0xff]
    %v477 = vld [vmem:[#allocation5 + $0xd18] sm:$0xff]
    %v478 = vld [vmem:[#allocation5 + $0xd20] sm:$0xff]
    %v479 = vld [vmem:[#allocation5 + $0xd28] sm:$0xff]
    %v480 = vld [vmem:[#allocation5 + $0xd30] sm:$0xff]
    %v481 = vld [vmem:[#allocation5 + $0xd38] sm:$0xff]
    %v482 = vld [vmem:[#allocation5 + $0xd40] sm:$0xff]
    %v483 = vld [vmem:[#allocation5 + $0xd48] sm:$0xff]
    %v484 = vld [vmem:[#allocation5 + $0xd50] sm:$0x3]
    %v485 = vld [vmem:[#allocation5 + $0xd58] sm:$0x3]
    %v486 = vld [vmem:[#allocation5 + $0xd60] sm:$0x3]
    %v487 = vld [vmem:[#allocation5 + $0xd68] sm:$0x3]
    %v488 = vld [vmem:[#allocation5 + $0xd70] sm:$0x3]
    %v489 = vld [vmem:[#allocation5 + $0xd78] sm:$0x3]
    %v490 = vld [vmem:[#allocation7] sm:$0x1f]
    %v492 = vlaneseq
    %v493 = vshrl.u32 %v492, 7
    %v494 = vsub.s32 0, %v493
    %v495 = vrot.slane %v490, %v494
    %v496 = vlaneseq
    %v497 = vshrl.u32 %v496, 7
    %v498 = vsub.s32 1, %v497
    %v499 = vrot.slane %v490, %v498
    %v500 = vlaneseq
    %v501 = vshrl.u32 %v500, 7
    %v502 = vsub.s32 2, %v501
    %v503 = vrot.slane %v490, %v502
    %v504 = vlaneseq
    %v505 = vshrl.u32 %v504, 7
    %v506 = vsub.s32 3, %v505
    %v507 = vrot.slane %v490, %v506
    %v508 = vlaneseq
    %v509 = vshrl.u32 %v508, 7
    %v510 = vsub.s32 4, %v509
    %v511 = vrot.slane %v490, %v510
    %517 = vmatprep.subr.mxu0 %v149
    %518 = vmatpush1.xpose.msra.mxu0 %v148
    %519 = vmatprep.subr.mxu0 %v143
    %520 = vmatpush1.xpose.msra.mxu0 %v142
    %521 = vmatprep.subr.mxu0 %v137
    %522 = vmatpush1.xpose.msra.mxu0 %v136
    %523 = vmatprep.subr.mxu0 %v131
    %524 = vmatpush1.xpose.msra.mxu0 %v130
    %525 = vmatprep.subr.mxu0 %v125
    %526 = vmatpush1.xpose.msra.mxu0 %v124
    %527 = vmatprep.subr.mxu0 %v119
    %528 = vmatpush1.xpose.msra.mxu0 %v118
    %529 = vmatprep.subr.mxu0 %v113
    %530 = vmatpush1.xpose.msra.mxu0 %v112
    %531 = vmatprep.subr.mxu0 %v107
    %532 = vmatpush1.xpose.msra.mxu0 %v106
    %533 = vmatprep.subr.mxu0 %v101
    %534 = vmatpush1.xpose.msra.mxu0 %v100
    %535 = vmatprep.subr.mxu0 %v95
    %536 = vmatpush1.xpose.msra.mxu0 %v94
    %537 = vmatprep.subr.mxu0 %v89
    %538 = vmatpush1.xpose.msra.mxu0 %v88
    %539 = vmatprep.subr.mxu0 %v83
    %540 = vmatpush1.xpose.msra.mxu0 %v82
    %541 = vmatprep.subr.mxu0 %v77
    %542 = vmatpush1.xpose.msra.mxu0 %v76
    %543 = vmatprep.subr.mxu0 %v71
    %544 = vmatpush1.xpose.msra.mxu0 %v70
    %545 = vmatprep.subr.mxu0 %v65
    %546 = vmatpush1.xpose.msra.mxu0 %v64
    %547 = vmatprep.subr.mxu0 %v59
    %548 = vmatpush1.xpose.msra.mxu0 %v58
    %549 = vmatprep.subr.mxu0 %v245
    %550 = vmatpush2.xpose.msra.mxu0 %v244
    %551 = vmatprep.subr.mxu0 %v239
    %552 = vmatpush2.xpose.msra.mxu0 %v238
    %553 = vmatprep.subr.mxu0 %v233
    %554 = vmatpush2.xpose.msra.mxu0 %v232
    %555 = vmatprep.subr.mxu0 %v227
    %556 = vmatpush2.xpose.msra.mxu0 %v226
    %557 = vmatprep.subr.mxu0 %v221
    %558 = vmatpush2.xpose.msra.mxu0 %v220
    %559 = vmatprep.subr.mxu0 %v215
    %560 = vmatpush2.xpose.msra.mxu0 %v214
    %561 = vmatprep.subr.mxu0 %v209
    %562 = vmatpush2.xpose.msra.mxu0 %v208
    %563 = vmatprep.subr.mxu0 %v203
    %564 = vmatpush2.xpose.msra.mxu0 %v202
    %565 = vmatprep.subr.mxu0 %v197
    %566 = vmatpush2.xpose.msra.mxu0 %v196
    %567 = vmatprep.subr.mxu0 %v191
    %568 = vmatpush2.xpose.msra.mxu0 %v190
    %569 = vmatprep.subr.mxu0 %v185
    %570 = vmatpush2.xpose.msra.mxu0 %v184
    %571 = vmatprep.subr.mxu0 %v179
    %572 = vmatpush2.xpose.msra.mxu0 %v178
    %573 = vmatprep.subr.mxu0 %v173
    %574 = vmatpush2.xpose.msra.mxu0 %v172
    %575 = vmatprep.subr.mxu0 %v167
    %576 = vmatpush2.xpose.msra.mxu0 %v166
    %577 = vmatprep.subr.mxu0 %v161
    %578 = vmatpush2.xpose.msra.mxu0 %v160
    %579 = vmatprep.subr.mxu0 %v155
    %580 = vmatpush2.xpose.msra.mxu0 %v154
    %581 = vmatprep.mubr.f32.mxu0 %v53
    %582 = vmatmul.mubr.f32.gmra.mxu0 %v52
    %v583 = vpop.f32.mrf.mxu0
    %v584 = vadd.f32 %v495, %v583
    %v585 = vpop.f32.mrf.mxu0
    %v586 = vadd.f32 %v499, %v585
    %587 = vdwg.mxu0
    %588 = vmatprep.subr.mxu0 %v151
    %589 = vmatpush1.xpose.msra.mxu0 %v150
    %590 = vmatprep.subr.mxu0 %v145
    %591 = vmatpush1.xpose.msra.mxu0 %v144
    %592 = vmatprep.subr.mxu0 %v139
    %593 = vmatpush1.xpose.msra.mxu0 %v138
    %594 = vmatprep.subr.mxu0 %v133
    %595 = vmatpush1.xpose.msra.mxu0 %v132
    %596 = vmatprep.subr.mxu0 %v127
    %597 = vmatpush1.xpose.msra.mxu0 %v126
    %598 = vmatprep.subr.mxu0 %v121
    %599 = vmatpush1.xpose.msra.mxu0 %v120
    %600 = vmatprep.subr.mxu0 %v115
    %601 = vmatpush1.xpose.msra.mxu0 %v114
    %602 = vmatprep.subr.mxu0 %v109
    %603 = vmatpush1.xpose.msra.mxu0 %v108
    %604 = vmatprep.subr.mxu0 %v103
    %605 = vmatpush1.xpose.msra.mxu0 %v102
    %606 = vmatprep.subr.mxu0 %v97
    %607 = vmatpush1.xpose.msra.mxu0 %v96
    %608 = vmatprep.subr.mxu0 %v91
    %609 = vmatpush1.xpose.msra.mxu0 %v90
    %610 = vmatprep.subr.mxu0 %v85
    %611 = vmatpush1.xpose.msra.mxu0 %v84
    %612 = vmatprep.subr.mxu0 %v79
    %613 = vmatpush1.xpose.msra.mxu0 %v78
    %614 = vmatprep.subr.mxu0 %v73
    %615 = vmatpush1.xpose.msra.mxu0 %v72
    %616 = vmatprep.subr.mxu0 %v67
    %617 = vmatpush1.xpose.msra.mxu0 %v66
    %618 = vmatprep.subr.mxu0 %v61
    %619 = vmatpush1.xpose.msra.mxu0 %v60
    %620 = vmatprep.subr.mxu0 %v247
    %621 = vmatpush2.xpose.msra.mxu0 %v246
    %622 = vmatprep.subr.mxu0 %v241
    %623 = vmatpush2.xpose.msra.mxu0 %v240
    %624 = vmatprep.subr.mxu0 %v235
    %625 = vmatpush2.xpose.msra.mxu0 %v234
    %626 = vmatprep.subr.mxu0 %v229
    %627 = vmatpush2.xpose.msra.mxu0 %v228
    %628 = vmatprep.subr.mxu0 %v223
    %629 = vmatpush2.xpose.msra.mxu0 %v222
    %630 = vmatprep.subr.mxu0 %v217
    %631 = vmatpush2.xpose.msra.mxu0 %v216
    %632 = vmatprep.subr.mxu0 %v211
    %633 = vmatpush2.xpose.msra.mxu0 %v210
    %634 = vmatprep.subr.mxu0 %v205
    %635 = vmatpush2.xpose.msra.mxu0 %v204
    %636 = vmatprep.subr.mxu0 %v199
    %637 = vmatpush2.xpose.msra.mxu0 %v198
    %638 = vmatprep.subr.mxu0 %v193
    %639 = vmatpush2.xpose.msra.mxu0 %v192
    %640 = vmatprep.subr.mxu0 %v187
    %641 = vmatpush2.xpose.msra.mxu0 %v186
    %642 = vmatprep.subr.mxu0 %v181
    %643 = vmatpush2.xpose.msra.mxu0 %v180
    %644 = vmatprep.subr.mxu0 %v175
    %645 = vmatpush2.xpose.msra.mxu0 %v174
    %646 = vmatprep.subr.mxu0 %v169
    %647 = vmatpush2.xpose.msra.mxu0 %v168
    %648 = vmatprep.subr.mxu0 %v163
    %649 = vmatpush2.xpose.msra.mxu0 %v162
    %650 = vmatprep.subr.mxu0 %v157
    %651 = vmatpush2.xpose.msra.mxu0 %v156
    %652 = vmatprep.mubr.f32.mxu0 %v55
    %653 = vmatmul.mubr.f32.gmra.mxu0 %v54
    %v654 = vpop.f32.mrf.mxu0
    %v655 = vadd.f32 %v584, %v654
    %v656 = vpop.f32.mrf.mxu0
    %v657 = vadd.f32 %v586, %v656
    %658 = vdwg.mxu0
    %659 = vmatprep.subr.mxu0 %v153
    %660 = vmatpush1.xpose.msra.mxu0 %v152
    %661 = vmatprep.subr.mxu0 %v147
    %662 = vmatpush1.xpose.msra.mxu0 %v146
    %663 = vmatprep.subr.mxu0 %v141
    %664 = vmatpush1.xpose.msra.mxu0 %v140
    %665 = vmatprep.subr.mxu0 %v135
    %666 = vmatpush1.xpose.msra.mxu0 %v134
    %667 = vmatprep.subr.mxu0 %v129
    %668 = vmatpush1.xpose.msra.mxu0 %v128
    %669 = vmatprep.subr.mxu0 %v123
    %670 = vmatpush1.xpose.msra.mxu0 %v122
    %671 = vmatprep.subr.mxu0 %v117
    %672 = vmatpush1.xpose.msra.mxu0 %v116
    %673 = vmatprep.subr.mxu0 %v111
    %674 = vmatpush1.xpose.msra.mxu0 %v110
    %675 = vmatprep.subr.mxu0 %v105
    %676 = vmatpush1.xpose.msra.mxu0 %v104
    %677 = vmatprep.subr.mxu0 %v99
    %678 = vmatpush1.xpose.msra.mxu0 %v98
    %679 = vmatprep.subr.mxu0 %v93
    %680 = vmatpush1.xpose.msra.mxu0 %v92
    %681 = vmatprep.subr.mxu0 %v87
    %682 = vmatpush1.xpose.msra.mxu0 %v86
    %683 = vmatprep.subr.mxu0 %v81
    %684 = vmatpush1.xpose.msra.mxu0 %v80
    %685 = vmatprep.subr.mxu0 %v75
    %686 = vmatpush1.xpose.msra.mxu0 %v74
    %687 = vmatprep.subr.mxu0 %v69
    %688 = vmatpush1.xpose.msra.mxu0 %v68
    %689 = vmatprep.subr.mxu0 %v63
    %690 = vmatpush1.xpose.msra.mxu0 %v62
    %691 = vmatprep.subr.mxu0 %v249
    %692 = vmatpush2.xpose.msra.mxu0 %v248
    %693 = vmatprep.subr.mxu0 %v243
    %694 = vmatpush2.xpose.msra.mxu0 %v242
    %695 = vmatprep.subr.mxu0 %v237
    %696 = vmatpush2.xpose.msra.mxu0 %v236
    %697 = vmatprep.subr.mxu0 %v231
    %698 = vmatpush2.xpose.msra.mxu0 %v230
    %699 = vmatprep.subr.mxu0 %v225
    %700 = vmatpush2.xpose.msra.mxu0 %v224
    %701 = vmatprep.subr.mxu0 %v219
    %702 = vmatpush2.xpose.msra.mxu0 %v218
    %703 = vmatprep.subr.mxu0 %v213
    %704 = vmatpush2.xpose.msra.mxu0 %v212
    %705 = vmatprep.subr.mxu0 %v207
    %706 = vmatpush2.xpose.msra.mxu0 %v206
    %707 = vmatprep.subr.mxu0 %v201
    %708 = vmatpush2.xpose.msra.mxu0 %v200
    %709 = vmatprep.subr.mxu0 %v195
    %710 = vmatpush2.xpose.msra.mxu0 %v194
    %711 = vmatprep.subr.mxu0 %v189
    %712 = vmatpush2.xpose.msra.mxu0 %v188
    %713 = vmatprep.subr.mxu0 %v183
    %714 = vmatpush2.xpose.msra.mxu0 %v182
    %715 = vmatprep.subr.mxu0 %v177
    %716 = vmatpush2.xpose.msra.mxu0 %v176
    %717 = vmatprep.subr.mxu0 %v171
    %718 = vmatpush2.xpose.msra.mxu0 %v170
    %719 = vmatprep.subr.mxu0 %v165
    %720 = vmatpush2.xpose.msra.mxu0 %v164
    %721 = vmatprep.subr.mxu0 %v159
    %722 = vmatpush2.xpose.msra.mxu0 %v158
    %723 = vmatprep.mubr.f32.mxu0 %v57
    %724 = vmatmul.mubr.f32.gmra.mxu0 %v56
    %v725 = vpop.f32.mrf.mxu0
    %v726 = vadd.f32 %v655, %v725
    %v727 = vpop.f32.mrf.mxu0
    %v728 = vadd.f32 %v657, %v727
    %729 = vdwg.mxu0
    %730 = vmatprep.subr.mxu0 %v341
    %731 = vmatpush1.xpose.msra.mxu0 %v340
    %732 = vmatprep.subr.mxu0 %v335
    %733 = vmatpush1.xpose.msra.mxu0 %v334
    %734 = vmatprep.subr.mxu0 %v329
    %735 = vmatpush1.xpose.msra.mxu0 %v328
    %736 = vmatprep.subr.mxu0 %v323
    %737 = vmatpush1.xpose.msra.mxu0 %v322
    %738 = vmatprep.subr.mxu0 %v317
    %739 = vmatpush1.xpose.msra.mxu0 %v316
    %740 = vmatprep.subr.mxu0 %v311
    %741 = vmatpush1.xpose.msra.mxu0 %v310
    %742 = vmatprep.subr.mxu0 %v305
    %743 = vmatpush1.xpose.msra.mxu0 %v304
    %744 = vmatprep.subr.mxu0 %v299
    %745 = vmatpush1.xpose.msra.mxu0 %v298
    %746 = vmatprep.subr.mxu0 %v293
    %747 = vmatpush1.xpose.msra.mxu0 %v292
    %748 = vmatprep.subr.mxu0 %v287
    %749 = vmatpush1.xpose.msra.mxu0 %v286
    %750 = vmatprep.subr.mxu0 %v281
    %751 = vmatpush1.xpose.msra.mxu0 %v280
    %752 = vmatprep.subr.mxu0 %v275
    %753 = vmatpush1.xpose.msra.mxu0 %v274
    %754 = vmatprep.subr.mxu0 %v269
    %755 = vmatpush1.xpose.msra.mxu0 %v268
    %756 = vmatprep.subr.mxu0 %v263
    %757 = vmatpush1.xpose.msra.mxu0 %v262
    %758 = vmatprep.subr.mxu0 %v257
    %759 = vmatpush1.xpose.msra.mxu0 %v256
    %760 = vmatprep.subr.mxu0 %v251
    %761 = vmatpush1.xpose.msra.mxu0 %v250
    %762 = vmatprep.subr.mxu0 %v437
    %763 = vmatpush2.xpose.msra.mxu0 %v436
    %764 = vmatprep.subr.mxu0 %v431
    %765 = vmatpush2.xpose.msra.mxu0 %v430
    %766 = vmatprep.subr.mxu0 %v425
    %767 = vmatpush2.xpose.msra.mxu0 %v424
    %768 = vmatprep.subr.mxu0 %v419
    %769 = vmatpush2.xpose.msra.mxu0 %v418
    %770 = vmatprep.subr.mxu0 %v413
    %771 = vmatpush2.xpose.msra.mxu0 %v412
    %772 = vmatprep.subr.mxu0 %v407
    %773 = vmatpush2.xpose.msra.mxu0 %v406
    %774 = vmatprep.subr.mxu0 %v401
    %775 = vmatpush2.xpose.msra.mxu0 %v400
    %776 = vmatprep.subr.mxu0 %v395
    %777 = vmatpush2.xpose.msra.mxu0 %v394
    %778 = vmatprep.subr.mxu0 %v389
    %779 = vmatpush2.xpose.msra.mxu0 %v388
    %780 = vmatprep.subr.mxu0 %v383
    %781 = vmatpush2.xpose.msra.mxu0 %v382
    %782 = vmatprep.subr.mxu0 %v377
    %783 = vmatpush2.xpose.msra.mxu0 %v376
    %784 = vmatprep.subr.mxu0 %v371
    %785 = vmatpush2.xpose.msra.mxu0 %v370
    %786 = vmatprep.subr.mxu0 %v365
    %787 = vmatpush2.xpose.msra.mxu0 %v364
    %788 = vmatprep.subr.mxu0 %v359
    %789 = vmatpush2.xpose.msra.mxu0 %v358
    %790 = vmatprep.subr.mxu0 %v353
    %791 = vmatpush2.xpose.msra.mxu0 %v352
    %792 = vmatprep.subr.mxu0 %v347
    %793 = vmatpush2.xpose.msra.mxu0 %v346
    %794 = vmatprep.mubr.f32.mxu0 %v53
    %795 = vmatmul.mubr.f32.gmra.mxu0 %v52
    %v796 = vpop.f32.mrf.mxu0
    %v797 = vadd.f32 %v503, %v796
    %v798 = vpop.f32.mrf.mxu0
    %v799 = vadd.f32 %v507, %v798
    %800 = vdwg.mxu0
    %801 = vmatprep.subr.mxu0 %v343
    %802 = vmatpush1.xpose.msra.mxu0 %v342
    %803 = vmatprep.subr.mxu0 %v337
    %804 = vmatpush1.xpose.msra.mxu0 %v336
    %805 = vmatprep.subr.mxu0 %v331
    %806 = vmatpush1.xpose.msra.mxu0 %v330
    %807 = vmatprep.subr.mxu0 %v325
    %808 = vmatpush1.xpose.msra.mxu0 %v324
    %809 = vmatprep.subr.mxu0 %v319
    %810 = vmatpush1.xpose.msra.mxu0 %v318
    %811 = vmatprep.subr.mxu0 %v313
    %812 = vmatpush1.xpose.msra.mxu0 %v312
    %813 = vmatprep.subr.mxu0 %v307
    %814 = vmatpush1.xpose.msra.mxu0 %v306
    %815 = vmatprep.subr.mxu0 %v301
    %816 = vmatpush1.xpose.msra.mxu0 %v300
    %817 = vmatprep.subr.mxu0 %v295
    %818 = vmatpush1.xpose.msra.mxu0 %v294
    %819 = vmatprep.subr.mxu0 %v289
    %820 = vmatpush1.xpose.msra.mxu0 %v288
    %821 = vmatprep.subr.mxu0 %v283
    %822 = vmatpush1.xpose.msra.mxu0 %v282
    %823 = vmatprep.subr.mxu0 %v277
    %824 = vmatpush1.xpose.msra.mxu0 %v276
    %825 = vmatprep.subr.mxu0 %v271
    %826 = vmatpush1.xpose.msra.mxu0 %v270
    %827 = vmatprep.subr.mxu0 %v265
    %828 = vmatpush1.xpose.msra.mxu0 %v264
    %829 = vmatprep.subr.mxu0 %v259
    %830 = vmatpush1.xpose.msra.mxu0 %v258
    %831 = vmatprep.subr.mxu0 %v253
    %832 = vmatpush1.xpose.msra.mxu0 %v252
    %833 = vmatprep.subr.mxu0 %v439
    %834 = vmatpush2.xpose.msra.mxu0 %v438
    %835 = vmatprep.subr.mxu0 %v433
    %836 = vmatpush2.xpose.msra.mxu0 %v432
    %837 = vmatprep.subr.mxu0 %v427
    %838 = vmatpush2.xpose.msra.mxu0 %v426
    %839 = vmatprep.subr.mxu0 %v421
    %840 = vmatpush2.xpose.msra.mxu0 %v420
    %841 = vmatprep.subr.mxu0 %v415
    %842 = vmatpush2.xpose.msra.mxu0 %v414
    %843 = vmatprep.subr.mxu0 %v409
    %844 = vmatpush2.xpose.msra.mxu0 %v408
    %845 = vmatprep.subr.mxu0 %v403
    %846 = vmatpush2.xpose.msra.mxu0 %v402
    %847 = vmatprep.subr.mxu0 %v397
    %848 = vmatpush2.xpose.msra.mxu0 %v396
    %849 = vmatprep.subr.mxu0 %v391
    %850 = vmatpush2.xpose.msra.mxu0 %v390
    %851 = vmatprep.subr.mxu0 %v385
    %852 = vmatpush2.xpose.msra.mxu0 %v384
    %853 = vmatprep.subr.mxu0 %v379
    %854 = vmatpush2.xpose.msra.mxu0 %v378
    %855 = vmatprep.subr.mxu0 %v373
    %856 = vmatpush2.xpose.msra.mxu0 %v372
    %857 = vmatprep.subr.mxu0 %v367
    %858 = vmatpush2.xpose.msra.mxu0 %v366
    %859 = vmatprep.subr.mxu0 %v361
    %860 = vmatpush2.xpose.msra.mxu0 %v360
    %861 = vmatprep.subr.mxu0 %v355
    %862 = vmatpush2.xpose.msra.mxu0 %v354
    %863 = vmatprep.subr.mxu0 %v349
    %864 = vmatpush2.xpose.msra.mxu0 %v348
    %865 = vmatprep.mubr.f32.mxu0 %v55
    %866 = vmatmul.mubr.f32.gmra.mxu0 %v54
    %v867 = vpop.f32.mrf.mxu0
    %v868 = vadd.f32 %v797, %v867
    %v869 = vpop.f32.mrf.mxu0
    %v870 = vadd.f32 %v799, %v869
    %871 = vdwg.mxu0
    %872 = vmatprep.subr.mxu0 %v345
    %873 = vmatpush1.xpose.msra.mxu0 %v344
    %874 = vmatprep.subr.mxu0 %v339
    %875 = vmatpush1.xpose.msra.mxu0 %v338
    %876 = vmatprep.subr.mxu0 %v333
    %877 = vmatpush1.xpose.msra.mxu0 %v332
    %878 = vmatprep.subr.mxu0 %v327
    %879 = vmatpush1.xpose.msra.mxu0 %v326
    %880 = vmatprep.subr.mxu0 %v321
    %881 = vmatpush1.xpose.msra.mxu0 %v320
    %882 = vmatprep.subr.mxu0 %v315
    %883 = vmatpush1.xpose.msra.mxu0 %v314
    %884 = vmatprep.subr.mxu0 %v309
    %885 = vmatpush1.xpose.msra.mxu0 %v308
    %886 = vmatprep.subr.mxu0 %v303
    %887 = vmatpush1.xpose.msra.mxu0 %v302
    %888 = vmatprep.subr.mxu0 %v297
    %889 = vmatpush1.xpose.msra.mxu0 %v296
    %890 = vmatprep.subr.mxu0 %v291
    %891 = vmatpush1.xpose.msra.mxu0 %v290
    %892 = vmatprep.subr.mxu0 %v285
    %893 = vmatpush1.xpose.msra.mxu0 %v284
    %894 = vmatprep.subr.mxu0 %v279
    %895 = vmatpush1.xpose.msra.mxu0 %v278
    %896 = vmatprep.subr.mxu0 %v273
    %897 = vmatpush1.xpose.msra.mxu0 %v272
    %898 = vmatprep.subr.mxu0 %v267
    %899 = vmatpush1.xpose.msra.mxu0 %v266
    %900 = vmatprep.subr.mxu0 %v261
    %901 = vmatpush1.xpose.msra.mxu0 %v260
    %902 = vmatprep.subr.mxu0 %v255
    %903 = vmatpush1.xpose.msra.mxu0 %v254
    %904 = vmatprep.subr.mxu0 %v441
    %905 = vmatpush2.xpose.msra.mxu0 %v440
    %906 = vmatprep.subr.mxu0 %v435
    %907 = vmatpush2.xpose.msra.mxu0 %v434
    %908 = vmatprep.subr.mxu0 %v429
    %909 = vmatpush2.xpose.msra.mxu0 %v428
    %910 = vmatprep.subr.mxu0 %v423
    %911 = vmatpush2.xpose.msra.mxu0 %v422
    %912 = vmatprep.subr.mxu0 %v417
    %913 = vmatpush2.xpose.msra.mxu0 %v416
    %914 = vmatprep.subr.mxu0 %v411
    %915 = vmatpush2.xpose.msra.mxu0 %v410
    %916 = vmatprep.subr.mxu0 %v405
    %917 = vmatpush2.xpose.msra.mxu0 %v404
    %918 = vmatprep.subr.mxu0 %v399
    %919 = vmatpush2.xpose.msra.mxu0 %v398
    %920 = vmatprep.subr.mxu0 %v393
    %921 = vmatpush2.xpose.msra.mxu0 %v392
    %922 = vmatprep.subr.mxu0 %v387
    %923 = vmatpush2.xpose.msra.mxu0 %v386
    %924 = vmatprep.subr.mxu0 %v381
    %925 = vmatpush2.xpose.msra.mxu0 %v380
    %926 = vmatprep.subr.mxu0 %v375
    %927 = vmatpush2.xpose.msra.mxu0 %v374
    %928 = vmatprep.subr.mxu0 %v369
    %929 = vmatpush2.xpose.msra.mxu0 %v368
    %930 = vmatprep.subr.mxu0 %v363
    %931 = vmatpush2.xpose.msra.mxu0 %v362
    %932 = vmatprep.subr.mxu0 %v357
    %933 = vmatpush2.xpose.msra.mxu0 %v356
    %934 = vmatprep.subr.mxu0 %v351
    %935 = vmatpush2.xpose.msra.mxu0 %v350
    %936 = vmatprep.mubr.f32.mxu0 %v57
    %937 = vmatmul.mubr.f32.gmra.mxu0 %v56
    %v938 = vpop.f32.mrf.mxu0
    %v939 = vadd.f32 %v868, %v938
    %v940 = vpop.f32.mrf.mxu0
    %v941 = vadd.f32 %v870, %v940
    %942 = vdwg.mxu0
    %943 = vmatprep.subr.mxu0 0.0
    %944 = vmatpush1.xpose.msra.mxu0 0.0
    %945 = vmatprep.subr.mxu0 0.0
    %946 = vmatpush1.xpose.msra.mxu0 0.0
    %947 = vmatprep.subr.mxu0 0.0
    %948 = vmatpush1.xpose.msra.mxu0 0.0
    %949 = vmatprep.subr.mxu0 0.0
    %950 = vmatpush1.xpose.msra.mxu0 0.0
    %951 = vmatprep.subr.mxu0 0.0
    %952 = vmatpush1.xpose.msra.mxu0 0.0
    %953 = vmatprep.subr.mxu0 0.0
    %954 = vmatpush1.xpose.msra.mxu0 0.0
    %955 = vmatprep.subr.mxu0 0.0
    %956 = vmatpush1.xpose.msra.mxu0 0.0
    %957 = vmatprep.subr.mxu0 0.0
    %958 = vmatpush1.xpose.msra.mxu0 0.0
    %959 = vmatprep.subr.mxu0 %v485
    %960 = vmatpush1.xpose.msra.mxu0 %v484
    %961 = vmatprep.subr.mxu0 %v479
    %962 = vmatpush1.xpose.msra.mxu0 %v478
    %963 = vmatprep.subr.mxu0 %v473
    %964 = vmatpush1.xpose.msra.mxu0 %v472
    %965 = vmatprep.subr.mxu0 %v467
    %966 = vmatpush1.xpose.msra.mxu0 %v466
    %967 = vmatprep.subr.mxu0 %v461
    %968 = vmatpush1.xpose.msra.mxu0 %v460
    %969 = vmatprep.subr.mxu0 %v455
    %970 = vmatpush1.xpose.msra.mxu0 %v454
    %971 = vmatprep.subr.mxu0 %v449
    %972 = vmatpush1.xpose.msra.mxu0 %v448
    %973 = vmatprep.subr.mxu0 %v443
    %974 = vmatpush1.xpose.msra.mxu0 %v442
    %975 = vmatprep.subr.mxu0 0.0
    %976 = vmatpush2.xpose.msra.mxu0 0.0
    %977 = vmatprep.subr.mxu0 0.0
    %978 = vmatpush2.xpose.msra.mxu0 0.0
    %979 = vmatprep.subr.mxu0 0.0
    %980 = vmatpush2.xpose.msra.mxu0 0.0
    %981 = vmatprep.subr.mxu0 0.0
    %982 = vmatpush2.xpose.msra.mxu0 0.0
    %983 = vmatprep.subr.mxu0 0.0
    %984 = vmatpush2.xpose.msra.mxu0 0.0
    %985 = vmatprep.subr.mxu0 0.0
    %986 = vmatpush2.xpose.msra.mxu0 0.0
    %987 = vmatprep.subr.mxu0 0.0
    %988 = vmatpush2.xpose.msra.mxu0 0.0
    %989 = vmatprep.subr.mxu0 0.0
    %990 = vmatpush2.xpose.msra.mxu0 0.0
    %991 = vmatprep.subr.mxu0 0.0
    %992 = vmatpush2.xpose.msra.mxu0 0.0
    %993 = vmatprep.subr.mxu0 0.0
    %994 = vmatpush2.xpose.msra.mxu0 0.0
    %995 = vmatprep.subr.mxu0 0.0
    %996 = vmatpush2.xpose.msra.mxu0 0.0
    %997 = vmatprep.subr.mxu0 0.0
    %998 = vmatpush2.xpose.msra.mxu0 0.0
    %999 = vmatprep.subr.mxu0 0.0
    %1000 = vmatpush2.xpose.msra.mxu0 0.0
    %1001 = vmatprep.subr.mxu0 0.0
    %1002 = vmatpush2.xpose.msra.mxu0 0.0
    %1003 = vmatprep.subr.mxu0 0.0
    %1004 = vmatpush2.xpose.msra.mxu0 0.0
    %1005 = vmatprep.subr.mxu0 0.0
    %1006 = vmatpush2.xpose.msra.mxu0 0.0
    %1007 = vmatprep.mubr.f32.mxu0 %v53
    %1008 = vmatmul.mubr.f32.gmra.mxu0 %v52
    %v1009 = vpop.f32.mrf.mxu0
    %v1010 = vadd.f32 %v511, %v1009
    %v1011 = vpop.f32.mrf.mxu0
    %1012 = vdwg.mxu0
    %1013 = vmatprep.subr.mxu0 0.0
    %1014 = vmatpush1.xpose.msra.mxu0 0.0
    %1015 = vmatprep.subr.mxu0 0.0
    %1016 = vmatpush1.xpose.msra.mxu0 0.0
    %1017 = vmatprep.subr.mxu0 0.0
    %1018 = vmatpush1.xpose.msra.mxu0 0.0
    %1019 = vmatprep.subr.mxu0 0.0
    %1020 = vmatpush1.xpose.msra.mxu0 0.0
    %1021 = vmatprep.subr.mxu0 0.0
    %1022 = vmatpush1.xpose.msra.mxu0 0.0
    %1023 = vmatprep.subr.mxu0 0.0
    %1024 = vmatpush1.xpose.msra.mxu0 0.0
    %1025 = vmatprep.subr.mxu0 0.0
    %1026 = vmatpush1.xpose.msra.mxu0 0.0
    %1027 = vmatprep.subr.mxu0 0.0
    %1028 = vmatpush1.xpose.msra.mxu0 0.0
    %1029 = vmatprep.subr.mxu0 %v487
    %1030 = vmatpush1.xpose.msra.mxu0 %v486
    %1031 = vmatprep.subr.mxu0 %v481
    %1032 = vmatpush1.xpose.msra.mxu0 %v480
    %1033 = vmatprep.subr.mxu0 %v475
    %1034 = vmatpush1.xpose.msra.mxu0 %v474
    %1035 = vmatprep.subr.mxu0 %v469
    %1036 = vmatpush1.xpose.msra.mxu0 %v468
    %1037 = vmatprep.subr.mxu0 %v463
    %1038 = vmatpush1.xpose.msra.mxu0 %v462
    %1039 = vmatprep.subr.mxu0 %v457
    %1040 = vmatpush1.xpose.msra.mxu0 %v456
    %1041 = vmatprep.subr.mxu0 %v451
    %1042 = vmatpush1.xpose.msra.mxu0 %v450
    %1043 = vmatprep.subr.mxu0 %v445
    %1044 = vmatpush1.xpose.msra.mxu0 %v444
    %1045 = vmatprep.subr.mxu0 0.0
    %1046 = vmatpush2.xpose.msra.mxu0 0.0
    %1047 = vmatprep.subr.mxu0 0.0
    %1048 = vmatpush2.xpose.msra.mxu0 0.0
    %1049 = vmatprep.subr.mxu0 0.0
    %1050 = vmatpush2.xpose.msra.mxu0 0.0
    %1051 = vmatprep.subr.mxu0 0.0
    %1052 = vmatpush2.xpose.msra.mxu0 0.0
    %1053 = vmatprep.subr.mxu0 0.0
    %1054 = vmatpush2.xpose.msra.mxu0 0.0
    %1055 = vmatprep.subr.mxu0 0.0
    %1056 = vmatpush2.xpose.msra.mxu0 0.0
    %1057 = vmatprep.subr.mxu0 0.0
    %1058 = vmatpush2.xpose.msra.mxu0 0.0
    %1059 = vmatprep.subr.mxu0 0.0
    %1060 = vmatpush2.xpose.msra.mxu0 0.0
    %1061 = vmatprep.subr.mxu0 0.0
    %1062 = vmatpush2.xpose.msra.mxu0 0.0
    %1063 = vmatprep.subr.mxu0 0.0
    %1064 = vmatpush2.xpose.msra.mxu0 0.0
    %1065 = vmatprep.subr.mxu0 0.0
    %1066 = vmatpush2.xpose.msra.mxu0 0.0
    %1067 = vmatprep.subr.mxu0 0.0
    %1068 = vmatpush2.xpose.msra.mxu0 0.0
    %1069 = vmatprep.subr.mxu0 0.0
    %1070 = vmatpush2.xpose.msra.mxu0 0.0
    %1071 = vmatprep.subr.mxu0 0.0
    %1072 = vmatpush2.xpose.msra.mxu0 0.0
    %1073 = vmatprep.subr.mxu0 0.0
    %1074 = vmatpush2.xpose.msra.mxu0 0.0
    %1075 = vmatprep.subr.mxu0 0.0
    %1076 = vmatpush2.xpose.msra.mxu0 0.0
    %1077 = vmatprep.mubr.f32.mxu0 %v55
    %1078 = vmatmul.mubr.f32.gmra.mxu0 %v54
    %v1079 = vpop.f32.mrf.mxu0
    %v1080 = vadd.f32 %v1010, %v1079
    %v1081 = vpop.f32.mrf.mxu0
    %1082 = vdwg.mxu0
    %1083 = vmatprep.subr.mxu0 0.0
    %1084 = vmatpush1.xpose.msra.mxu0 0.0
    %1085 = vmatprep.subr.mxu0 0.0
    %1086 = vmatpush1.xpose.msra.mxu0 0.0
    %1087 = vmatprep.subr.mxu0 0.0
    %1088 = vmatpush1.xpose.msra.mxu0 0.0
    %1089 = vmatprep.subr.mxu0 0.0
    %1090 = vmatpush1.xpose.msra.mxu0 0.0
    %1091 = vmatprep.subr.mxu0 0.0
    %1092 = vmatpush1.xpose.msra.mxu0 0.0
    %1093 = vmatprep.subr.mxu0 0.0
    %1094 = vmatpush1.xpose.msra.mxu0 0.0
    %1095 = vmatprep.subr.mxu0 0.0
    %1096 = vmatpush1.xpose.msra.mxu0 0.0
    %1097 = vmatprep.subr.mxu0 0.0
    %1098 = vmatpush1.xpose.msra.mxu0 0.0
    %1099 = vmatprep.subr.mxu0 %v489
    %1100 = vmatpush1.xpose.msra.mxu0 %v488
    %1101 = vmatprep.subr.mxu0 %v483
    %1102 = vmatpush1.xpose.msra.mxu0 %v482
    %1103 = vmatprep.subr.mxu0 %v477
    %1104 = vmatpush1.xpose.msra.mxu0 %v476
    %1105 = vmatprep.subr.mxu0 %v471
    %1106 = vmatpush1.xpose.msra.mxu0 %v470
    %1107 = vmatprep.subr.mxu0 %v465
    %1108 = vmatpush1.xpose.msra.mxu0 %v464
    %1109 = vmatprep.subr.mxu0 %v459
    %1110 = vmatpush1.xpose.msra.mxu0 %v458
    %1111 = vmatprep.subr.mxu0 %v453
    %1112 = vmatpush1.xpose.msra.mxu0 %v452
    %1113 = vmatprep.subr.mxu0 %v447
    %1114 = vmatpush1.xpose.msra.mxu0 %v446
    %1115 = vmatprep.subr.mxu0 0.0
    %1116 = vmatpush2.xpose.msra.mxu0 0.0
    %1117 = vmatprep.subr.mxu0 0.0
    %1118 = vmatpush2.xpose.msra.mxu0 0.0
    %1119 = vmatprep.subr.mxu0 0.0
    %1120 = vmatpush2.xpose.msra.mxu0 0.0
    %1121 = vmatprep.subr.mxu0 0.0
    %1122 = vmatpush2.xpose.msra.mxu0 0.0
    %1123 = vmatprep.subr.mxu0 0.0
    %1124 = vmatpush2.xpose.msra.mxu0 0.0
    %1125 = vmatprep.subr.mxu0 0.0
    %1126 = vmatpush2.xpose.msra.mxu0 0.0
    %1127 = vmatprep.subr.mxu0 0.0
    %1128 = vmatpush2.xpose.msra.mxu0 0.0
    %1129 = vmatprep.subr.mxu0 0.0
    %1130 = vmatpush2.xpose.msra.mxu0 0.0
    %1131 = vmatprep.subr.mxu0 0.0
    %1132 = vmatpush2.xpose.msra.mxu0 0.0
    %1133 = vmatprep.subr.mxu0 0.0
    %1134 = vmatpush2.xpose.msra.mxu0 0.0
    %1135 = vmatprep.subr.mxu0 0.0
    %1136 = vmatpush2.xpose.msra.mxu0 0.0
    %1137 = vmatprep.subr.mxu0 0.0
    %1138 = vmatpush2.xpose.msra.mxu0 0.0
    %1139 = vmatprep.subr.mxu0 0.0
    %1140 = vmatpush2.xpose.msra.mxu0 0.0
    %1141 = vmatprep.subr.mxu0 0.0
    %1142 = vmatpush2.xpose.msra.mxu0 0.0
    %1143 = vmatprep.subr.mxu0 0.0
    %1144 = vmatpush2.xpose.msra.mxu0 0.0
    %1145 = vmatprep.subr.mxu0 0.0
    %1146 = vmatpush2.xpose.msra.mxu0 0.0
    %1147 = vmatprep.mubr.f32.mxu0 %v57
    %1148 = vmatmul.mubr.f32.gmra.mxu0 %v56
    %v1149 = vpop.f32.mrf.mxu0
    %v1150 = vadd.f32 %v1080, %v1149
    %v1151 = vpop.f32.mrf.mxu0
    %1152 = vdwg.mxu0
    %1153 = vst [vmem:[#allocation8] sm:$0xff] %v726
    %1154 = vst [vmem:[#allocation8 + $0x8] sm:$0xff] %v728
    %1155 = vst [vmem:[#allocation8 + $0x10] sm:$0xff] %v939
    %1156 = vst [vmem:[#allocation8 + $0x18] sm:$0xff] %v941
    %vm1157 = vcmask 474112
    %1158 = vst.msk [vmem:[#allocation8 + $0x20] sm:$0xff] %vm1157, %v1150
    // Predicated region
    $region26: #{tpu_custom_call.1} parent=1 // pred_check
      _
    $region27: #{tpu_custom_call.1} parent=1 // pred_check_branch
      %1160 = sbr.rel (0) target = $region29
    $region28: #{tpu_custom_call.1} parent=1 // pred_region
      %s1162 = ssub.s32 640, 640
      %1163 = vsyncadd [#allocation4], %s1162
      %s1165 = sshll.u32 [#allocation8], 4
      %s1166 = int_to_ptr.vmem [resolvable:$true] %s1165
      %1168 = dma.vmem_to_hbm [thread:$0]  %s1166, 640, %s3, [#allocation4]
    $region29: #{tpu_custom_call.1} parent=1 // pred_fallthru
      _
    // Predicated region
    $region30: #{tpu_custom_call.1} parent=1 // pred_check
      _
    $region31: #{tpu_custom_call.1} parent=1 // pred_check_branch
      %1170 = sbr.rel (0) target = $region33
    $region32: #{tpu_custom_call.1} parent=1 // pred_region
      %1171 = dma.done [#allocation4], 640
    $region33: #{tpu_custom_call.1} parent=1 // pred_fallthru
      _
    %1172 = vsyncpa [#allocation3], 1
    %1173 = vsyncpa [#allocation6], 1
    %1174 = vsyncpa [#allocation4], 1

</llo_original>
